<compile_context>
chip_gen: v5e
topology: v5e:2x2
jax: 0.10.0
libtpu: 0.0.40
codegen_flags: <defaults>
</compile_context>

<pallas_src>
import jax
import jax.numpy as jnp
from jax.experimental import pallas as pl
from jax.experimental.pallas import tpu as pltpu
import numpy as np


def _round_up(x, m):
    return ((x + m - 1) // m) * m


def rnn_kernel(tok_ref, ptab_ref, whh_ref, wfc_ref, bfc_ref, out_ref):
    """Single-invocation fused forward.

    tok_ref : (seq_len * B, 1) int32   tokens, time-major, batch padded to B
    ptab_ref: (V, H)  float32          emb_table @ W_ih^T + b_ih + b_hh  (zero padded)
    whh_ref : (H, H)  float32          W_hh^T (zero padded)
    wfc_ref : (H, O)  float32          W_fc^T (zero padded)
    bfc_ref : (1, O)  float32          b_fc   (zero padded)
    out_ref : (B, O)  float32          logits (padded; wrapper slices)
    """
    b_pad = out_ref.shape[0]
    v_pad = ptab_ref.shape[0]
    n_tok = tok_ref.shape[0]
    seq_len = n_tok // b_pad

    # ---- Phase 1: fused embedding gather + input projection (+ combined RNN bias) for
    # ---- ALL timesteps at once via a one-hot MXU matmul.  Result stays in vregs
    # ---- (n_tok x H f32 is only a handful of vregs); no VMEM scratch round-trip.
    tok = tok_ref[...]                                                  # (n_tok, 1) int32
    vocab_ids = jax.lax.broadcasted_iota(jnp.int32, (n_tok, v_pad), 1)  # (n_tok, V)
    onehot = (tok == vocab_ids).astype(jnp.float32)                     # (n_tok, V)
    xp = jnp.dot(onehot, ptab_ref[...],
                 preferred_element_type=jnp.float32)                    # (n_tok, H)

    # ---- Phase 2: sequential recurrence, fully unrolled (static Python loop).
    # ---- Step 0 peeled: h0 == 0  =>  h1 = tanh(x_proj[0]), no matmul needed.
    # ---- Each remaining step: one (B,H)@(H,H) MXU matmul + add + EUP tanh.
    w_hh = whh_ref[...]
    h = jnp.tanh(xp[0:b_pad, :])                                        # (B, H)
    for t in range(1, seq_len):
        x_t = xp[t * b_pad:(t + 1) * b_pad, :]                          # static slice, 1 vreg
        h = jnp.tanh(x_t + jnp.dot(h, w_hh, preferred_element_type=jnp.float32))

    # ---- Phase 3: final fully-connected layer. Lane-dense (B, O) unmasked store.
    out_ref[...] = (jnp.dot(h, wfc_ref[...], preferred_element_type=jnp.float32)
                    + bfc_ref[...]).astype(out_ref.dtype)


def rnn_model_forward(text, emb_table, w_ih, w_hh, b_ih, b_hh, w_fc, b_fc):
    """text: (seq_len, batch) int32. Returns (batch, output_dim) float32."""
    seq_len, batch = text.shape
    vocab, _emb_dim = emb_table.shape
    hidden_dim = w_hh.shape[0]
    output_dim = w_fc.shape[0]

    # Padded (lane/sublane aligned) sizes.
    B = _round_up(batch, 8)          # sublane
    H = _round_up(hidden_dim, 128)   # lanes
    O = _round_up(output_dim, 128)   # lanes
    V = _round_up(vocab, 8)          # table leading dim only needs sublane alignment

    # Weight-only hoist: fold embedding table, input projection and both RNN biases into
    # one lookup table: proj_table[v] = emb_table[v] @ W_ih^T + b_ih + b_hh.
    # (Gather and row-matmul commute exactly, so the math is unchanged.)
    proj = emb_table @ w_ih.T + (b_ih + b_hh)[None, :]                  # (vocab, hidden)
    proj_pad = jnp.zeros((V, H), jnp.float32).at[:vocab, :hidden_dim].set(proj)

    whh_pad = jnp.zeros((H, H), jnp.float32).at[:hidden_dim, :hidden_dim].set(w_hh.T)
    wfc_pad = jnp.zeros((H, O), jnp.float32).at[:hidden_dim, :output_dim].set(w_fc.T)
    bfc_pad = jnp.zeros((1, O), jnp.float32).at[0, :output_dim].set(b_fc)

    # Tokens: pad batch with token 0 (padded rows compute harmless extra work,
    # independent per row, and are sliced off at the end).
    tok = jnp.zeros((seq_len, B), jnp.int32).at[:, :batch].set(text)
    tok2d = tok.reshape(seq_len * B, 1)

    grid_spec = pltpu.PrefetchScalarGridSpec(
        num_scalar_prefetch=0,
        grid=(1,),  # single step: the recurrence lives inside the kernel
        in_specs=[
            pl.BlockSpec((seq_len * B, 1), lambda i: (0, 0)),
            pl.BlockSpec((V, H), lambda i: (0, 0)),
            pl.BlockSpec((H, H), lambda i: (0, 0)),
            pl.BlockSpec((H, O), lambda i: (0, 0)),
            pl.BlockSpec((1, O), lambda i: (0, 0)),
        ],
        out_specs=pl.BlockSpec((B, O), lambda i: (0, 0)),
    )

    out_pad = pl.pallas_call(
        rnn_kernel,
        out_shape=jax.ShapeDtypeStruct((B, O), jnp.float32),
        grid_spec=grid_spec,
        compiler_params=pltpu.CompilerParams(dimension_semantics=("arbitrary",)),
    )(tok2d, proj_pad, whh_pad, wfc_pad, bfc_pad)

    return out_pad[:batch, :output_dim]


def reference_forward(text, emb_table, w_ih, w_hh, b_ih, b_hh, w_fc, b_fc):
    """Pure-JAX reference replicating the PyTorch forward (non-LSTM branch)."""
    seq_len, batch = text.shape
    hidden_dim = w_hh.shape[0]
    embedded = emb_table[text]
    h = jnp.zeros((batch, hidden_dim), jnp.float32)
    for t in range(seq_len):
        h = jnp.tanh(embedded[t] @ w_ih.T + b_ih + h @ w_hh.T + b_hh)
    return h @ w_fc.T + b_fc


# TODO(synk): the LSTMCell branch of the reference forward (hidden + cell state) is not
# implemented; this kernel covers the vanilla tanh RNNCell branch only.

if __name__ == "__main__":
    # Small, module-consistent shapes.
    input_dim = 20      # vocab size
    embedding_dim = 16
    hidden_dim = 32
    output_dim = 8
    seq_len = 8
    batch = 2

    key = jax.random.PRNGKey(0)
    k_emb, k_wih, k_whh, k_bih, k_bhh, k_wfc, k_bfc, k_txt = jax.random.split(key, 8)

    emb_table = jax.random.normal(k_emb, (input_dim, embedding_dim), jnp.float32)
    s_rnn = 1.0 / np.sqrt(hidden_dim)
    w_ih = jax.random.uniform(k_wih, (hidden_dim, embedding_dim), jnp.float32, -s_rnn, s_rnn)
    w_hh = jax.random.uniform(k_whh, (hidden_dim, hidden_dim), jnp.float32, -s_rnn, s_rnn)
    b_ih = jax.random.uniform(k_bih, (hidden_dim,), jnp.float32, -s_rnn, s_rnn)
    b_hh = jax.random.uniform(k_bhh, (hidden_dim,), jnp.float32, -s_rnn, s_rnn)
    s_fc = 1.0 / np.sqrt(hidden_dim)
    w_fc = jax.random.uniform(k_wfc, (output_dim, hidden_dim), jnp.float32, -s_fc, s_fc)
    b_fc = jax.random.uniform(k_bfc, (output_dim,), jnp.float32, -s_fc, s_fc)

    text = jax.random.randint(k_txt, (seq_len, batch), 0, input_dim, jnp.int32)

    fwd = jax.jit(rnn_model_forward)
    out = fwd(text, emb_table, w_ih, w_hh, b_ih, b_hh, w_fc, b_fc)
    out = jax.block_until_ready(out)

    ref = reference_forward(text, emb_table, w_ih, w_hh, b_ih, b_hh, w_fc, b_fc)
    np.testing.assert_allclose(np.asarray(out), np.asarray(ref), rtol=1e-5, atol=1e-5)

    print("KERNEL_OK")
</pallas_src>

<mosaic_0001>
module attributes {stable_mosaic.version = 11 : i64} {
  func.func @rnn_kernel(%arg0: i32, %arg1: memref<64x1xi32, #tpu.memory_space<vmem>>, %arg2: memref<24x128xf32, #tpu.memory_space<vmem>>, %arg3: memref<128x128xf32, #tpu.memory_space<vmem>>, %arg4: memref<128x128xf32, #tpu.memory_space<vmem>>, %arg5: memref<1x128xf32, #tpu.memory_space<vmem>>, %arg6: memref<8x128xf32, #tpu.memory_space<vmem>>) attributes {dimension_semantics = [#tpu.dimension_semantics<arbitrary>], iteration_bounds = array<i64: 1>, scalar_prefetch = 0 : i64, scratch_operands = 0 : i64, tpu.core_type = #tpu.core_type<tc>, window_params = [{pipeline_mode = #tpu.pipeline_mode<synchronous>, transform_indices = @transform_0, window_bounds = array<i64: 64, 1>}, {pipeline_mode = #tpu.pipeline_mode<synchronous>, transform_indices = @transform_1, window_bounds = array<i64: 24, 128>}, {pipeline_mode = #tpu.pipeline_mode<synchronous>, transform_indices = @transform_2, window_bounds = array<i64: 128, 128>}, {pipeline_mode = #tpu.pipeline_mode<synchronous>, transform_indices = @transform_3, window_bounds = array<i64: 128, 128>}, {pipeline_mode = #tpu.pipeline_mode<synchronous>, transform_indices = @transform_4, window_bounds = array<i64: 1, 128>}, {pipeline_mode = #tpu.pipeline_mode<synchronous>, transform_indices = @transform_5, window_bounds = array<i64: 8, 128>}]} {
    %c0 = arith.constant 0 : index
    %c0_0 = arith.constant 0 : index
    %0 = vector.load %arg1[%c0, %c0_0] : memref<64x1xi32, #tpu.memory_space<vmem>>, vector<64x1xi32>
    %1 = tpu.iota {dimensions = array<i32: 1>} : vector<64x24xi32>
    %2 = vector.broadcast %0 : vector<64x1xi32> to vector<64x24xi32>
    %3 = arith.cmpi eq, %2, %1 : vector<64x24xi32>
    %4 = arith.extui %3 : vector<64x24xi1> to vector<64x24xi32>
    %5 = arith.sitofp %4 : vector<64x24xi32> to vector<64x24xf32>
    %c0_1 = arith.constant 0 : index
    %c0_2 = arith.constant 0 : index
    %6 = vector.load %arg2[%c0_1, %c0_2] : memref<24x128xf32, #tpu.memory_space<vmem>>, vector<24x128xf32>
    %cst = arith.constant dense<0.000000e+00> : vector<64x128xf32>
    %7 = tpu.matmul %5, %6, %cst {dimension_numbers = #tpu.dot_dimension_numbers<[1], [0], [0], [1], [0, 0, 1, 1], [], []>} : vector<64x24xf32>, vector<24x128xf32>, vector<64x128xf32> -> vector<64x128xf32>
    %c0_3 = arith.constant 0 : index
    %c0_4 = arith.constant 0 : index
    %8 = vector.load %arg3[%c0_3, %c0_4] : memref<128x128xf32, #tpu.memory_space<vmem>>, vector<128x128xf32>
    %9 = vector.extract_strided_slice %7 {offsets = [0, 0], sizes = [8, 128], strides = [1, 1]} : vector<64x128xf32> to vector<8x128xf32>
    %10 = math.tanh %9 : vector<8x128xf32>
    %11 = vector.extract_strided_slice %7 {offsets = [8, 0], sizes = [8, 128], strides = [1, 1]} : vector<64x128xf32> to vector<8x128xf32>
    %cst_5 = arith.constant dense<0.000000e+00> : vector<8x128xf32>
    %12 = tpu.matmul %10, %8, %cst_5 {dimension_numbers = #tpu.dot_dimension_numbers<[1], [0], [0], [1], [0, 0, 1, 1], [], []>} : vector<8x128xf32>, vector<128x128xf32>, vector<8x128xf32> -> vector<8x128xf32>
    %13 = arith.addf %11, %12 : vector<8x128xf32>
    %14 = math.tanh %13 : vector<8x128xf32>
    %15 = vector.extract_strided_slice %7 {offsets = [16, 0], sizes = [8, 128], strides = [1, 1]} : vector<64x128xf32> to vector<8x128xf32>
    %cst_6 = arith.constant dense<0.000000e+00> : vector<8x128xf32>
    %16 = tpu.matmul %14, %8, %cst_6 {dimension_numbers = #tpu.dot_dimension_numbers<[1], [0], [0], [1], [0, 0, 1, 1], [], []>} : vector<8x128xf32>, vector<128x128xf32>, vector<8x128xf32> -> vector<8x128xf32>
    %17 = arith.addf %15, %16 : vector<8x128xf32>
    %18 = math.tanh %17 : vector<8x128xf32>
    %19 = vector.extract_strided_slice %7 {offsets = [24, 0], sizes = [8, 128], strides = [1, 1]} : vector<64x128xf32> to vector<8x128xf32>
    %cst_7 = arith.constant dense<0.000000e+00> : vector<8x128xf32>
    %20 = tpu.matmul %18, %8, %cst_7 {dimension_numbers = #tpu.dot_dimension_numbers<[1], [0], [0], [1], [0, 0, 1, 1], [], []>} : vector<8x128xf32>, vector<128x128xf32>, vector<8x128xf32> -> vector<8x128xf32>
    %21 = arith.addf %19, %20 : vector<8x128xf32>
    %22 = math.tanh %21 : vector<8x128xf32>
    %23 = vector.extract_strided_slice %7 {offsets = [32, 0], sizes = [8, 128], strides = [1, 1]} : vector<64x128xf32> to vector<8x128xf32>
    %cst_8 = arith.constant dense<0.000000e+00> : vector<8x128xf32>
    %24 = tpu.matmul %22, %8, %cst_8 {dimension_numbers = #tpu.dot_dimension_numbers<[1], [0], [0], [1], [0, 0, 1, 1], [], []>} : vector<8x128xf32>, vector<128x128xf32>, vector<8x128xf32> -> vector<8x128xf32>
    %25 = arith.addf %23, %24 : vector<8x128xf32>
    %26 = math.tanh %25 : vector<8x128xf32>
    %27 = vector.extract_strided_slice %7 {offsets = [40, 0], sizes = [8, 128], strides = [1, 1]} : vector<64x128xf32> to vector<8x128xf32>
    %cst_9 = arith.constant dense<0.000000e+00> : vector<8x128xf32>
    %28 = tpu.matmul %26, %8, %cst_9 {dimension_numbers = #tpu.dot_dimension_numbers<[1], [0], [0], [1], [0, 0, 1, 1], [], []>} : vector<8x128xf32>, vector<128x128xf32>, vector<8x128xf32> -> vector<8x128xf32>
    %29 = arith.addf %27, %28 : vector<8x128xf32>
    %30 = math.tanh %29 : vector<8x128xf32>
    %31 = vector.extract_strided_slice %7 {offsets = [48, 0], sizes = [8, 128], strides = [1, 1]} : vector<64x128xf32> to vector<8x128xf32>
    %cst_10 = arith.constant dense<0.000000e+00> : vector<8x128xf32>
    %32 = tpu.matmul %30, %8, %cst_10 {dimension_numbers = #tpu.dot_dimension_numbers<[1], [0], [0], [1], [0, 0, 1, 1], [], []>} : vector<8x128xf32>, vector<128x128xf32>, vector<8x128xf32> -> vector<8x128xf32>
    %33 = arith.addf %31, %32 : vector<8x128xf32>
    %34 = math.tanh %33 : vector<8x128xf32>
    %35 = vector.extract_strided_slice %7 {offsets = [56, 0], sizes = [8, 128], strides = [1, 1]} : vector<64x128xf32> to vector<8x128xf32>
    %cst_11 = arith.constant dense<0.000000e+00> : vector<8x128xf32>
    %36 = tpu.matmul %34, %8, %cst_11 {dimension_numbers = #tpu.dot_dimension_numbers<[1], [0], [0], [1], [0, 0, 1, 1], [], []>} : vector<8x128xf32>, vector<128x128xf32>, vector<8x128xf32> -> vector<8x128xf32>
    %37 = arith.addf %35, %36 : vector<8x128xf32>
    %38 = math.tanh %37 : vector<8x128xf32>
    %c0_12 = arith.constant 0 : index
    %c0_13 = arith.constant 0 : index
    %39 = vector.load %arg4[%c0_12, %c0_13] : memref<128x128xf32, #tpu.memory_space<vmem>>, vector<128x128xf32>
    %cst_14 = arith.constant dense<0.000000e+00> : vector<8x128xf32>
    %40 = tpu.matmul %38, %39, %cst_14 {dimension_numbers = #tpu.dot_dimension_numbers<[1], [0], [0], [1], [0, 0, 1, 1], [], []>} : vector<8x128xf32>, vector<128x128xf32>, vector<8x128xf32> -> vector<8x128xf32>
    %c0_15 = arith.constant 0 : index
    %c0_16 = arith.constant 0 : index
    %41 = vector.load %arg5[%c0_15, %c0_16] : memref<1x128xf32, #tpu.memory_space<vmem>>, vector<1x128xf32>
    %42 = vector.broadcast %41 : vector<1x128xf32> to vector<8x128xf32>
    %43 = arith.addf %40, %42 : vector<8x128xf32>
    %c0_17 = arith.constant 0 : index
    %c0_18 = arith.constant 0 : index
    %44 = vector.load %arg6[%c0_17, %c0_18] : memref<8x128xf32, #tpu.memory_space<vmem>>, vector<8x128xf32>
    tpu.vector_store %arg6[%c0_17, %c0_18], %43 {strides = array<i32>} : memref<8x128xf32, #tpu.memory_space<vmem>>, vector<8x128xf32>,
    return
  }
  func.func @transform_0(%arg0: i32) -> (i32, i32) {
    %c0_i32 = arith.constant 0 : i32
    %c0_i32_0 = arith.constant 0 : i32
    %c0_i32_1 = arith.constant 0 : i32
    return %c0_i32, %c0_i32_0 : i32, i32
  }
  func.func @transform_1(%arg0: i32) -> (i32, i32) {
    %c0_i32 = arith.constant 0 : i32
    %c0_i32_0 = arith.constant 0 : i32
    %c0_i32_1 = arith.constant 0 : i32
    return %c0_i32, %c0_i32_0 : i32, i32
  }
  func.func @transform_2(%arg0: i32) -> (i32, i32) {
    %c0_i32 = arith.constant 0 : i32
    %c0_i32_0 = arith.constant 0 : i32
    %c0_i32_1 = arith.constant 0 : i32
    return %c0_i32, %c0_i32_0 : i32, i32
  }
  func.func @transform_3(%arg0: i32) -> (i32, i32) {
    %c0_i32 = arith.constant 0 : i32
    %c0_i32_0 = arith.constant 0 : i32
    %c0_i32_1 = arith.constant 0 : i32
    return %c0_i32, %c0_i32_0 : i32, i32
  }
  func.func @transform_4(%arg0: i32) -> (i32, i32) {
    %c0_i32 = arith.constant 0 : i32
    %c0_i32_0 = arith.constant 0 : i32
    %c0_i32_1 = arith.constant 0 : i32
    return %c0_i32, %c0_i32_0 : i32, i32
  }
  func.func @transform_5(%arg0: i32) -> (i32, i32) {
    %c0_i32 = arith.constant 0 : i32
    %c0_i32_0 = arith.constant 0 : i32
    %c0_i32_1 = arith.constant 0 : i32
    return %c0_i32, %c0_i32_0 : i32, i32
  }
}

</mosaic_0001>

<llo_original>
// kernel: rnn_model_forward.1
$region0: #{rnn_model_forward.1}
  #allocation0 [shape = 'u32[]', space=smem, size = 0x4, offset = 0x4, fixed_abs, tag = 'smem constant byte address 0x4 - core index']
  #allocation1 [shape = 'u32[72,128]{1,0:T(1,128)}', space=vmem, size = 0x9000, scoped, tag = 'internal scratch']
  %s0 = inlined_call_operand.vmem [shape: s32[64,1], index: 0, kind: input, shape index: {}]
  %s1 = inlined_call_operand.vmem [shape: f32[24,128], index: 1, kind: input, shape index: {}]
  %s2 = inlined_call_operand.vmem [shape: f32[128,128], index: 2, kind: input, shape index: {}]
  %s3 = inlined_call_operand.vmem [shape: f32[128,128], index: 3, kind: input, shape index: {}]
  %s4 = inlined_call_operand.vmem [shape: f32[1,128], index: 4, kind: input, shape index: {}]
  %s5 = inlined_call_operand.vmem [shape: f32[8,128], index: 5, kind: output, shape index: {}]
  %s6 = sld [smem:[#allocation0]]
  $region30: #{rnn_model_forward.1} parent=0
    _
  %s8 = ssub.s32 1, %s6
  %s9 = scalar_select 0, %s8, %s6
  // Predicated region
  $region2: #{rnn_model_forward.1} parent=0 // pred_check
    _
  $region3: #{rnn_model_forward.1} parent=0 // pred_check_branch
    %11 = sbr.rel (0) target = $region5
  $region4: #{rnn_model_forward.1} parent=0 // pred_region
    _
  $region5: #{rnn_model_forward.1} parent=0 // pred_fallthru
    _
  // Predicated region
  $region6: #{rnn_model_forward.1} parent=0 // pred_check
    _
  $region7: #{rnn_model_forward.1} parent=0 // pred_check_branch
    %13 = sbr.rel (0) target = $region9
  $region8: #{rnn_model_forward.1} parent=0 // pred_region
    _
  $region9: #{rnn_model_forward.1} parent=0 // pred_fallthru
    _
  // Predicated region
  $region10: #{rnn_model_forward.1} parent=0 // pred_check
    _
  $region11: #{rnn_model_forward.1} parent=0 // pred_check_branch
    %15 = sbr.rel (0) target = $region13
  $region12: #{rnn_model_forward.1} parent=0 // pred_region
    _
  $region13: #{rnn_model_forward.1} parent=0 // pred_fallthru
    _
  // Predicated region
  $region14: #{rnn_model_forward.1} parent=0 // pred_check
    _
  $region15: #{rnn_model_forward.1} parent=0 // pred_check_branch
    %17 = sbr.rel (0) target = $region17
  $region16: #{rnn_model_forward.1} parent=0 // pred_region
    _
  $region17: #{rnn_model_forward.1} parent=0 // pred_fallthru
    _
  // Predicated region
  $region18: #{rnn_model_forward.1} parent=0 // pred_check
    _
  $region19: #{rnn_model_forward.1} parent=0 // pred_check_branch
    %19 = sbr.rel (0) target = $region21
  $region20: #{rnn_model_forward.1} parent=0 // pred_region
    _
  $region21: #{rnn_model_forward.1} parent=0 // pred_fallthru
    _
  %v20 = vld [vmem:[%s0] sm:$0xff]
  %v21 = vld [vmem:[%s0 + $0x8] sm:$0xff]
  %v22 = vld [vmem:[%s0 + $0x10] sm:$0xff]
  %v23 = vld [vmem:[%s0 + $0x18] sm:$0xff]
  %v24 = vld [vmem:[%s0 + $0x20] sm:$0xff]
  %v25 = vld [vmem:[%s0 + $0x28] sm:$0xff]
  %v26 = vld [vmem:[%s0 + $0x30] sm:$0xff]
  %v27 = vld [vmem:[%s0 + $0x38] sm:$0xff]
  %v28 = vlaneseq
  %v29 = vand.u32 %v28, 127
  %30 = vset.pattern.permute.xlu0 0
  %31 = vperm.xlu0 %30, %v20
  %v32 = vpop.permute.xlu0 %31
  %33 = vset.pattern.permute.xlu0 0
  %34 = vperm.xlu0 %33, %v21
  %v35 = vpop.permute.xlu0 %34
  %36 = vset.pattern.permute.xlu0 0
  %37 = vperm.xlu0 %36, %v22
  %v38 = vpop.permute.xlu0 %37
  %39 = vset.pattern.permute.xlu0 0
  %40 = vperm.xlu0 %39, %v23
  %v41 = vpop.permute.xlu0 %40
  %42 = vset.pattern.permute.xlu0 0
  %43 = vperm.xlu0 %42, %v24
  %v44 = vpop.permute.xlu0 %43
  %45 = vset.pattern.permute.xlu0 0
  %46 = vperm.xlu0 %45, %v25
  %v47 = vpop.permute.xlu0 %46
  %48 = vset.pattern.permute.xlu0 0
  %49 = vperm.xlu0 %48, %v26
  %v50 = vpop.permute.xlu0 %49
  %51 = vset.pattern.permute.xlu0 0
  %52 = vperm.xlu0 %51, %v27
  %v53 = vpop.permute.xlu0 %52
  %vm54 = vcmp.eq.s32.totalorder %v32, %v29
  %vm55 = vcmp.eq.s32.totalorder %v35, %v29
  %vm56 = vcmp.eq.s32.totalorder %v38, %v29
  %vm57 = vcmp.eq.s32.totalorder %v41, %v29
  %vm58 = vcmp.eq.s32.totalorder %v44, %v29
  %vm59 = vcmp.eq.s32.totalorder %v47, %v29
  %vm60 = vcmp.eq.s32.totalorder %v50, %v29
  %vm61 = vcmp.eq.s32.totalorder %v53, %v29
  %v62 = vsel %vm54, 1, 0
  %v63 = vsel %vm55, 1, 0
  %v64 = vsel %vm56, 1, 0
  %v65 = vsel %vm57, 1, 0
  %v66 = vsel %vm58, 1, 0
  %v67 = vsel %vm59, 1, 0
  %v68 = vsel %vm60, 1, 0
  %v69 = vsel %vm61, 1, 0
  %v70 = vcvt.s32.f32 %v62
  %v71 = vcvt.s32.f32 %v63
  %v72 = vcvt.s32.f32 %v64
  %v73 = vcvt.s32.f32 %v65
  %v74 = vcvt.s32.f32 %v66
  %v75 = vcvt.s32.f32 %v67
  %v76 = vcvt.s32.f32 %v68
  %v77 = vcvt.s32.f32 %v69
  %v78 = vld [vmem:[%s1] sm:$0xff]
  %v79 = vld [vmem:[%s1 + $0x8] sm:$0xff]
  %v80 = vld [vmem:[%s1 + $0x10] sm:$0xff]
  %vm81 = vcmask 195584
  %v83 = vsel %vm81, %v70, 0
  %v86 = vsel %vm81, %v71, 0
  %v89 = vsel %vm81, %v72, 0
  %v92 = vsel %vm81, %v73, 0
  %v95 = vsel %vm81, %v74, 0
  %v98 = vsel %vm81, %v75, 0
  %v101 = vsel %vm81, %v76, 0
  %v104 = vsel %vm81, %v77, 0
  %106 = vmatpush.msra.mxu0 0.0
  %107 = vmatpush.msra.mxu0 0.0
  %108 = vmatpush.msra.mxu0 0.0
  %109 = vmatpush.msra.mxu0 0.0
  %110 = vmatpush.msra.mxu0 0.0
  %111 = vmatpush.msra.mxu0 0.0
  %112 = vmatpush.msra.mxu0 0.0
  %113 = vmatpush.msra.mxu0 0.0
  %114 = vmatpush.msra.mxu0 0.0
  %115 = vmatpush.msra.mxu0 0.0
  %116 = vmatpush.msra.mxu0 0.0
  %117 = vmatpush.msra.mxu0 0.0
  %118 = vmatpush.msra.mxu0 0.0
  %119 = vmatpush.msra.mxu0 %v80
  %120 = vmatpush.msra.mxu0 %v79
  %121 = vmatpush.msra.mxu0 %v78
  %122 = vmatmul.f32.gmra.mxu0 %v83
  %v123 = vpop.f32.mrf.mxu0
  %v124 = vadd.f32 0.0, %v123
  %125 = vmatmul.f32.gmra.mxu0 %v86
  %v126 = vpop.f32.mrf.mxu0
  %v127 = vadd.f32 0.0, %v126
  %128 = vmatmul.f32.gmra.mxu0 %v89
  %v129 = vpop.f32.mrf.mxu0
  %v130 = vadd.f32 0.0, %v129
  %131 = vmatmul.f32.gmra.mxu0 %v92
  %v132 = vpop.f32.mrf.mxu0
  %v133 = vadd.f32 0.0, %v132
  %134 = vmatmul.f32.gmra.mxu0 %v95
  %v135 = vpop.f32.mrf.mxu0
  %v136 = vadd.f32 0.0, %v135
  %137 = vmatmul.f32.gmra.mxu0 %v98
  %v138 = vpop.f32.mrf.mxu0
  %v139 = vadd.f32 0.0, %v138
  %140 = vmatmul.f32.gmra.mxu0 %v101
  %v141 = vpop.f32.mrf.mxu0
  %v142 = vadd.f32 0.0, %v141
  %143 = vmatmul.f32.gmra.mxu0 %v104
  %v144 = vpop.f32.mrf.mxu0
  %v145 = vadd.f32 0.0, %v144
  %146 = vdwg.mxu0
  %v147 = vld [vmem:[%s2] sm:$0xff]
  %v148 = vld [vmem:[%s2 + $0x8] sm:$0xff]
  %v149 = vld [vmem:[%s2 + $0x10] sm:$0xff]
  %v150 = vld [vmem:[%s2 + $0x18] sm:$0xff]
  %v151 = vld [vmem:[%s2 + $0x20] sm:$0xff]
  %v152 = vld [vmem:[%s2 + $0x28] sm:$0xff]
  %v153 = vld [vmem:[%s2 + $0x30] sm:$0xff]
  %v154 = vld [vmem:[%s2 + $0x38] sm:$0xff]
  %v155 = vld [vmem:[%s2 + $0x40] sm:$0xff]
  %v156 = vld [vmem:[%s2 + $0x48] sm:$0xff]
  %v157 = vld [vmem:[%s2 + $0x50] sm:$0xff]
  %v158 = vld [vmem:[%s2 + $0x58] sm:$0xff]
  %v159 = vld [vmem:[%s2 + $0x60] sm:$0xff]
  %v160 = vld [vmem:[%s2 + $0x68] sm:$0xff]
  %v161 = vld [vmem:[%s2 + $0x70] sm:$0xff]
  %v162 = vld [vmem:[%s2 + $0x78] sm:$0xff]
  %v163 = vtanh.pop %v124
  %164 = vmatpush.msra.mxu0 %v162
  %165 = vmatpush.msra.mxu0 %v161
  %166 = vmatpush.msra.mxu0 %v160
  %167 = vmatpush.msra.mxu0 %v159
  %168 = vmatpush.msra.mxu0 %v158
  %169 = vmatpush.msra.mxu0 %v157
  %170 = vmatpush.msra.mxu0 %v156
  %171 = vmatpush.msra.mxu0 %v155
  %172 = vmatpush.msra.mxu0 %v154
  %173 = vmatpush.msra.mxu0 %v153
  %174 = vmatpush.msra.mxu0 %v152
  %175 = vmatpush.msra.mxu0 %v151
  %176 = vmatpush.msra.mxu0 %v150
  %177 = vmatpush.msra.mxu0 %v149
  %178 = vmatpush.msra.mxu0 %v148
  %179 = vmatpush.msra.mxu0 %v147
  %180 = vmatmul.f32.gmra.mxu0 %v163
  %v181 = vpop.f32.mrf.mxu0
  %v182 = vadd.f32 0.0, %v181
  %183 = vdwg.mxu0
  %v184 = vadd.f32 %v127, %v182
  %v185 = vtanh.pop %v184
  %186 = vmatpush.msra.mxu0 %v162
  %187 = vmatpush.msra.mxu0 %v161
  %188 = vmatpush.msra.mxu0 %v160
  %189 = vmatpush.msra.mxu0 %v159
  %190 = vmatpush.msra.mxu0 %v158
  %191 = vmatpush.msra.mxu0 %v157
  %192 = vmatpush.msra.mxu0 %v156
  %193 = vmatpush.msra.mxu0 %v155
  %194 = vmatpush.msra.mxu0 %v154
  %195 = vmatpush.msra.mxu0 %v153
  %196 = vmatpush.msra.mxu0 %v152
  %197 = vmatpush.msra.mxu0 %v151
  %198 = vmatpush.msra.mxu0 %v150
  %199 = vmatpush.msra.mxu0 %v149
  %200 = vmatpush.msra.mxu0 %v148
  %201 = vmatpush.msra.mxu0 %v147
  %202 = vmatmul.f32.gmra.mxu0 %v185
  %v203 = vpop.f32.mrf.mxu0
  %v204 = vadd.f32 0.0, %v203
  %205 = vdwg.mxu0
  %v206 = vadd.f32 %v130, %v204
  %v207 = vtanh.pop %v206
  %208 = vmatpush.msra.mxu0 %v162
  %209 = vmatpush.msra.mxu0 %v161
  %210 = vmatpush.msra.mxu0 %v160
  %211 = vmatpush.msra.mxu0 %v159
  %212 = vmatpush.msra.mxu0 %v158
  %213 = vmatpush.msra.mxu0 %v157
  %214 = vmatpush.msra.mxu0 %v156
  %215 = vmatpush.msra.mxu0 %v155
  %216 = vmatpush.msra.mxu0 %v154
  %217 = vmatpush.msra.mxu0 %v153
  %218 = vmatpush.msra.mxu0 %v152
  %219 = vmatpush.msra.mxu0 %v151
  %220 = vmatpush.msra.mxu0 %v150
  %221 = vmatpush.msra.mxu0 %v149
  %222 = vmatpush.msra.mxu0 %v148
  %223 = vmatpush.msra.mxu0 %v147
  %224 = vmatmul.f32.gmra.mxu0 %v207
  %v225 = vpop.f32.mrf.mxu0
  %v226 = vadd.f32 0.0, %v225
  %227 = vdwg.mxu0
  %v228 = vadd.f32 %v133, %v226
  %v229 = vtanh.pop %v228
  %230 = vmatpush.msra.mxu0 %v162
  %231 = vmatpush.msra.mxu0 %v161
  %232 = vmatpush.msra.mxu0 %v160
  %233 = vmatpush.msra.mxu0 %v159
  %234 = vmatpush.msra.mxu0 %v158
  %235 = vmatpush.msra.mxu0 %v157
  %236 = vmatpush.msra.mxu0 %v156
  %237 = vmatpush.msra.mxu0 %v155
  %238 = vmatpush.msra.mxu0 %v154
  %239 = vmatpush.msra.mxu0 %v153
  %240 = vmatpush.msra.mxu0 %v152
  %241 = vmatpush.msra.mxu0 %v151
  %242 = vmatpush.msra.mxu0 %v150
  %243 = vmatpush.msra.mxu0 %v149
  %244 = vmatpush.msra.mxu0 %v148
  %245 = vmatpush.msra.mxu0 %v147
  %246 = vmatmul.f32.gmra.mxu0 %v229
  %v247 = vpop.f32.mrf.mxu0
  %v248 = vadd.f32 0.0, %v247
  %249 = vdwg.mxu0
  %v250 = vadd.f32 %v136, %v248
  %v251 = vtanh.pop %v250
  %252 = vmatpush.msra.mxu0 %v162
  %253 = vmatpush.msra.mxu0 %v161
  %254 = vmatpush.msra.mxu0 %v160
  %255 = vmatpush.msra.mxu0 %v159
  %256 = vmatpush.msra.mxu0 %v158
  %257 = vmatpush.msra.mxu0 %v157
  %258 = vmatpush.msra.mxu0 %v156
  %259 = vmatpush.msra.mxu0 %v155
  %260 = vmatpush.msra.mxu0 %v154
  %261 = vmatpush.msra.mxu0 %v153
  %262 = vmatpush.msra.mxu0 %v152
  %263 = vmatpush.msra.mxu0 %v151
  %264 = vmatpush.msra.mxu0 %v150
  %265 = vmatpush.msra.mxu0 %v149
  %266 = vmatpush.msra.mxu0 %v148
  %267 = vmatpush.msra.mxu0 %v147
  %268 = vmatmul.f32.gmra.mxu0 %v251
  %v269 = vpop.f32.mrf.mxu0
  %v270 = vadd.f32 0.0, %v269
  %271 = vdwg.mxu0
  %v272 = vadd.f32 %v139, %v270
  %v273 = vtanh.pop %v272
  %274 = vmatpush.msra.mxu0 %v162
  %275 = vmatpush.msra.mxu0 %v161
  %276 = vmatpush.msra.mxu0 %v160
  %277 = vmatpush.msra.mxu0 %v159
  %278 = vmatpush.msra.mxu0 %v158
  %279 = vmatpush.msra.mxu0 %v157
  %280 = vmatpush.msra.mxu0 %v156
  %281 = vmatpush.msra.mxu0 %v155
  %282 = vmatpush.msra.mxu0 %v154
  %283 = vmatpush.msra.mxu0 %v153
  %284 = vmatpush.msra.mxu0 %v152
  %285 = vmatpush.msra.mxu0 %v151
  %286 = vmatpush.msra.mxu0 %v150
  %287 = vmatpush.msra.mxu0 %v149
  %288 = vmatpush.msra.mxu0 %v148
  %289 = vmatpush.msra.mxu0 %v147
  %290 = vmatmul.f32.gmra.mxu0 %v273
  %v291 = vpop.f32.mrf.mxu0
  %v292 = vadd.f32 0.0, %v291
  %293 = vdwg.mxu0
  %v294 = vadd.f32 %v142, %v292
  %v295 = vtanh.pop %v294
  %296 = vmatpush.msra.mxu0 %v162
  %297 = vmatpush.msra.mxu0 %v161
  %298 = vmatpush.msra.mxu0 %v160
  %299 = vmatpush.msra.mxu0 %v159
  %300 = vmatpush.msra.mxu0 %v158
  %301 = vmatpush.msra.mxu0 %v157
  %302 = vmatpush.msra.mxu0 %v156
  %303 = vmatpush.msra.mxu0 %v155
  %304 = vmatpush.msra.mxu0 %v154
  %305 = vmatpush.msra.mxu0 %v153
  %306 = vmatpush.msra.mxu0 %v152
  %307 = vmatpush.msra.mxu0 %v151
  %308 = vmatpush.msra.mxu0 %v150
  %309 = vmatpush.msra.mxu0 %v149
  %310 = vmatpush.msra.mxu0 %v148
  %311 = vmatpush.msra.mxu0 %v147
  %312 = vmatmul.f32.gmra.mxu0 %v295
  %v313 = vpop.f32.mrf.mxu0
  %v314 = vadd.f32 0.0, %v313
  %315 = vdwg.mxu0
  %v316 = vadd.f32 %v145, %v314
  %v317 = vtanh.pop %v316
  %v318 = vld [vmem:[%s3] sm:$0xff]
  %v319 = vld [vmem:[%s3 + $0x8] sm:$0xff]
  %v320 = vld [vmem:[%s3 + $0x10] sm:$0xff]
  %v321 = vld [vmem:[%s3 + $0x18] sm:$0xff]
  %v322 = vld [vmem:[%s3 + $0x20] sm:$0xff]
  %v323 = vld [vmem:[%s3 + $0x28] sm:$0xff]
  %v324 = vld [vmem:[%s3 + $0x30] sm:$0xff]
  %v325 = vld [vmem:[%s3 + $0x38] sm:$0xff]
  %v326 = vld [vmem:[%s3 + $0x40] sm:$0xff]
  %v327 = vld [vmem:[%s3 + $0x48] sm:$0xff]
  %v328 = vld [vmem:[%s3 + $0x50] sm:$0xff]
  %v329 = vld [vmem:[%s3 + $0x58] sm:$0xff]
  %v330 = vld [vmem:[%s3 + $0x60] sm:$0xff]
  %v331 = vld [vmem:[%s3 + $0x68] sm:$0xff]
  %v332 = vld [vmem:[%s3 + $0x70] sm:$0xff]
  %v333 = vld [vmem:[%s3 + $0x78] sm:$0xff]
  %v334 = vld [vmem:[%s4] sm:$0x1]
  %v336 = vperm.slane %v334, 0
  %338 = vmatpush.msra.mxu0 %v333
  %339 = vmatpush.msra.mxu0 %v332
  %340 = vmatpush.msra.mxu0 %v331
  %341 = vmatpush.msra.mxu0 %v330
  %342 = vmatpush.msra.mxu0 %v329
  %343 = vmatpush.msra.mxu0 %v328
  %344 = vmatpush.msra.mxu0 %v327
  %345 = vmatpush.msra.mxu0 %v326
  %346 = vmatpush.msra.mxu0 %v325
  %347 = vmatpush.msra.mxu0 %v324
  %348 = vmatpush.msra.mxu0 %v323
  %349 = vmatpush.msra.mxu0 %v322
  %350 = vmatpush.msra.mxu0 %v321
  %351 = vmatpush.msra.mxu0 %v320
  %352 = vmatpush.msra.mxu0 %v319
  %353 = vmatpush.msra.mxu0 %v318
  %354 = vmatmul.f32.gmra.mxu0 %v317
  %v355 = vpop.f32.mrf.mxu0
  %v356 = vadd.f32 %v336, %v355
  %357 = vdwg.mxu0
  %358 = vst [vmem:[%s5] sm:$0xff] %v356
  // Predicated region
  $region22: #{rnn_model_forward.1} parent=0 // pred_check
    _
  $region23: #{rnn_model_forward.1} parent=0 // pred_check_branch
    %360 = sbr.rel (0) target = $region25
  $region24: #{rnn_model_forward.1} parent=0 // pred_region
    _
  $region25: #{rnn_model_forward.1} parent=0 // pred_fallthru
    _
  // Predicated region
  $region26: #{rnn_model_forward.1} parent=0 // pred_check
    _
  $region27: #{rnn_model_forward.1} parent=0 // pred_check_branch
    %362 = sbr.rel (0) target = $region29
  $region28: #{rnn_model_forward.1} parent=0 // pred_region
    _
  $region29: #{rnn_model_forward.1} parent=0 // pred_fallthru
    _

</llo_original>
